<compile_context>
chip_gen: v6e
topology: v6e:2x2x1
jax: 0.10.0
libtpu: 0.0.40
codegen_flags: <defaults>
</compile_context>

<pallas_src>
import functools

import jax
import jax.numpy as jnp
from jax import lax
from jax.experimental import pallas as pl
from jax.experimental.pallas import tpu as pltpu


def _vmem_config():
    """Generation-aware scoped-VMEM limit and per-step tile byte budget."""
    try:
        cap = int(pltpu.get_tpu_info().vmem_capacity_bytes)
    except Exception:
        cap = 64 * 1024 * 1024          # conservative fallback (valid on all gens)
    limit = min((cap * 3) // 4, 96 * 1024 * 1024)   # ~48 MiB on v7x, 96 MiB v5e/v6e
    budget = (limit * 3) // 4                        # ~25% headroom under the limit
    return limit, budget


def _sublane_align(itemsize):
    """Minimum sublane multiple for a packed dtype tile: f32->8, bf16->16, i8->32."""
    return {4: 8, 2: 16, 1: 32}.get(int(itemsize), 8)


def _pick_tile_rows(c, nrows, x_bytes, t_bytes, budget, align, max_rows=2048):
    """Pixel rows (of 128 lanes each) per grid step, sized by bytes.

    Double-buffered logits block (2*C*x_bytes/pixel) + double-buffered targets
    block (2*t_bytes/pixel) + ~8 f32 (rows,128) compute temporaries must fit
    the VMEM budget; capped at max_rows to keep compile size/latency sane.
    """
    per_row = 128 * (2 * c * x_bytes + 2 * t_bytes + 8 * 4)
    rows = (budget // per_row // align) * align
    rows = min(rows, (max_rows // align) * align)
    rows_needed = ((nrows + align - 1) // align) * align
    rows = min(rows, rows_needed)
    return max(rows, align)


def _focal_loss_kernel(x_ref, t_ref, out_ref, *, gamma, hw, mask_last):
    """One grid step: (C, R, 128) logits of one sample -> (8, 128) partial sums.

    x_ref  : (1, C, R, 128) logits (native dtype; cast to f32 per class)
    t_ref  : (1, R, 128) integer target class indices (native dtype)
    out_ref: (1, 8, 128) f32 per-sample partial-sum slab (resident across p_i)
    """
    p_i = pl.program_id(1)
    _, c, r, lanes = x_ref.shape

    @pl.when(p_i == 0)
    def _():
        out_ref[...] = jnp.zeros_like(out_ref)

    tgt = t_ref[0].astype(jnp.int32)                       # (R, 128)

    # Class max: unrolled per-class VPU max over dense (R,128) tiles.
    m = x_ref[0, 0].astype(jnp.float32)
    for ci in range(1, c):
        m = jnp.maximum(m, x_ref[0, ci].astype(jnp.float32))

    # Stable sum-exp + one-hot selection of the target class (no iota, no gather).
    sum_exp = jnp.zeros_like(m)
    exp_t = jnp.zeros_like(m)
    x_t = jnp.zeros_like(m)
    for ci in range(c):
        xc = x_ref[0, ci].astype(jnp.float32)
        e = jnp.exp(xc - m)
        sum_exp = sum_exp + e
        sel = tgt == ci
        exp_t = jnp.where(sel, e, exp_t)
        x_t = jnp.where(sel, xc, x_t)

    ce = jnp.maximum(m + jnp.log(sum_exp) - x_t, 0.0)       # cross-entropy >= 0
    # pt = exp(-ce); reuse exp(x_t - m) and an approximate EUP reciprocal.
    pt = exp_t * pl.reciprocal(sum_exp, approx=True)
    one_minus_pt = jnp.clip(1.0 - pt, 0.0, 1.0)             # guards the power

    g = float(gamma)
    if g == 0.0:
        focal = ce
    elif g.is_integer() and 1.0 <= g <= 8.0:
        w = one_minus_pt                                     # integer gamma -> muls
        for _ in range(int(g) - 1):
            w = w * one_minus_pt
        focal = w * ce
    else:
        focal = (one_minus_pt ** jnp.float32(g)) * ce

    def _accumulate(f):
        # (R,128) -> (8,128): group-of-8-sublane sums, pure VPU adds.
        psum = f.reshape(r // 8, 8, lanes).sum(axis=0)
        out_ref[...] = out_ref[...] + psum[None]

    if mask_last:
        last = pl.num_programs(1) - 1

        @pl.when(p_i == last)
        def _():
            row = lax.broadcasted_iota(jnp.int32, (r, lanes), 0)
            col = lax.broadcasted_iota(jnp.int32, (r, lanes), 1)
            pix = (p_i * r + row) * lanes + col
            _accumulate(jnp.where(pix < hw, focal, 0.0))

        @pl.when(p_i != last)
        def _():
            _accumulate(focal)
    else:
        _accumulate(focal)


def focal_loss(inputs_nchw, targets_nhw, *, alpha=1.0, gamma=2.0,
               reduction="mean"):
    """Pallas TPU focal loss. inputs: [N, C, H, W] float, targets: [N, H, W] int."""
    n, c, h, w = inputs_nchw.shape
    hw = h * w
    hw_pad = ((hw + 127) // 128) * 128
    nrows = hw_pad // 128

    x = inputs_nchw.reshape(n, c, hw)
    t = targets_nhw.reshape(n, hw)

    # Keep narrow integer targets native (cast happens in-kernel); only widen
    # dtypes a TPU kernel can't consume directly (int64 / bool / float).
    if not (jnp.issubdtype(t.dtype, jnp.integer) and t.dtype.itemsize <= 4):
        t = t.astype(jnp.int32)

    row_align = max(_sublane_align(x.dtype.itemsize), _sublane_align(t.dtype.itemsize))

    if hw_pad != hw:
        # TODO(synk): odd H*W needs one pad pass; padded pixels are masked in-kernel.
        x = jnp.pad(x, ((0, 0), (0, 0), (0, hw_pad - hw)))
        t = jnp.pad(t, ((0, 0), (0, hw_pad - hw)))

    # Free, layout-preserving reshapes: pixels split into rows of 128 lanes.
    x = x.reshape(n, c, nrows, 128)
    t = t.reshape(n, nrows, 128)

    vmem_limit, vmem_budget = _vmem_config()
    tile_rows = _pick_tile_rows(c, nrows, x.dtype.itemsize, t.dtype.itemsize,
                                vmem_budget, row_align)
    num_p = pl.cdiv(nrows, tile_rows)
    mask_last = (int(num_p) * tile_rows * 128) != hw

    kernel = functools.partial(
        _focal_loss_kernel,
        gamma=float(gamma),
        hw=int(hw),
        mask_last=bool(mask_last),
    )

    partials = pl.pallas_call(
        kernel,
        out_shape=jax.ShapeDtypeStruct((n, 8, 128), jnp.float32),
        grid_spec=pltpu.PrefetchScalarGridSpec(
            num_scalar_prefetch=0,
            grid=(n, num_p),
            in_specs=[
                pl.BlockSpec((1, c, tile_rows, 128), lambda ni, pi: (ni, 0, pi, 0)),
                pl.BlockSpec((1, tile_rows, 128), lambda ni, pi: (ni, pi, 0)),
            ],
            out_specs=pl.BlockSpec((1, 8, 128), lambda ni, pi: (ni, 0, 0)),
        ),
        compiler_params=pltpu.CompilerParams(
            dimension_semantics=("parallel", "arbitrary"),   # v7x megacore on N
            vmem_limit_bytes=int(vmem_limit),
        ),
    )(x, t)

    total = jnp.sum(partials)                 # tiny (N,8,128) reduce in XLA
    if reduction == "mean":
        total = total / jnp.float32(n * hw)
    if float(alpha) != 1.0:
        total = jnp.float32(alpha) * total    # alpha is linear -> applied once here
    return total


def _focal_loss_ref(inputs_nchw, targets_nhw, alpha=1.0, gamma=2.0,
                    reduction="mean"):
    """Pure-JAX reference matching F.cross_entropy + focal weighting."""
    logits = jnp.transpose(inputs_nchw, (0, 2, 3, 1)).astype(jnp.float32)
    logz = jax.scipy.special.logsumexp(logits, axis=-1)
    tgt_logit = jnp.take_along_axis(
        logits, targets_nhw[..., None].astype(jnp.int32), axis=-1)[..., 0]
    ce = logz - tgt_logit
    pt = jnp.exp(-ce)
    loss = alpha * (1.0 - pt) ** gamma * ce
    return loss.mean() if reduction == "mean" else loss.sum()


if __name__ == "__main__":
    key = jax.random.PRNGKey(0)
    k1, k2 = jax.random.split(key)

    N, C, H, W = 2, 4, 16, 16
    inputs = jax.random.normal(k1, (N, C, H, W), dtype=jnp.float32)
    targets = jax.random.randint(k2, (N, H, W), 0, C, dtype=jnp.int32)

    out = jax.block_until_ready(
        focal_loss(inputs, targets, alpha=1.0, gamma=2.0, reduction="mean"))
    ref = _focal_loss_ref(inputs, targets, 1.0, 2.0, "mean")
    # pt uses the EUP approximate reciprocal -> allow ~1e-3 relative slack.
    assert jnp.allclose(out, ref, rtol=5e-3, atol=1e-6), (out, ref)

    out_s = jax.block_until_ready(
        focal_loss(inputs, targets, alpha=1.0, gamma=2.0, reduction="sum"))
    ref_s = _focal_loss_ref(inputs, targets, 1.0, 2.0, "sum")
    assert jnp.allclose(out_s, ref_s, rtol=5e-3, atol=1e-4), (out_s, ref_s)

    print("KERNEL_OK")
</pallas_src>

<mosaic_0001>
module attributes {stable_mosaic.version = 11 : i64} {
  func.func @_focal_loss_kernel(%arg0: i32, %arg1: i32, %arg2: memref<1x4x8x128xf32, #tpu.memory_space<vmem>>, %arg3: memref<1x8x128xi32, #tpu.memory_space<vmem>>, %arg4: memref<1x8x128xf32, #tpu.memory_space<vmem>>) attributes {dimension_semantics = [#tpu.dimension_semantics<parallel>, #tpu.dimension_semantics<arbitrary>], iteration_bounds = array<i64: 2, 1>, scalar_prefetch = 0 : i64, scratch_operands = 0 : i64, tpu.core_type = #tpu.core_type<tc>, window_params = [{transform_indices = @transform_0, window_bounds = array<i64: 1, 4, 8, 128>}, {transform_indices = @transform_1, window_bounds = array<i64: 1, 8, 128>}, {transform_indices = @transform_2, window_bounds = array<i64: 1, 8, 128>}]} {
    %c0_i32 = arith.constant 0 : i32
    %0 = arith.cmpi eq, %arg1, %c0_i32 : i32
    %1 = arith.extui %0 : i1 to i32
    %c0_i32_0 = arith.constant 0 : i32
    %2 = arith.cmpi ne, %1, %c0_i32_0 : i32
    scf.if %2 {
      %cst_43 = arith.constant 0.000000e+00 : f32
      %76 = vector.broadcast %cst_43 : f32 to vector<1x8x128xf32>
      %c0_44 = arith.constant 0 : index
      %c0_45 = arith.constant 0 : index
      %c0_46 = arith.constant 0 : index
      %77 = vector.load %arg4[%c0_44, %c0_45, %c0_46] : memref<1x8x128xf32, #tpu.memory_space<vmem>>, vector<1x8x128xf32>
      tpu.vector_store %arg4[%c0_44, %c0_45, %c0_46], %76 {strides = array<i32>} : memref<1x8x128xf32, #tpu.memory_space<vmem>>, vector<1x8x128xf32>,
    } else {
    }
    %c0 = arith.constant 0 : index
    %c0_1 = arith.constant 0 : index
    %c0_2 = arith.constant 0 : index
    %3 = vector.load %arg3[%c0, %c0_1, %c0_2] : memref<1x8x128xi32, #tpu.memory_space<vmem>>, vector<1x8x128xi32>
    %4 = vector.shape_cast %3 : vector<1x8x128xi32> to vector<8x128xi32>
    %c0_3 = arith.constant 0 : index
    %c0_4 = arith.constant 0 : index
    %c0_5 = arith.constant 0 : index
    %c0_6 = arith.constant 0 : index
    %5 = vector.load %arg2[%c0_3, %c0_4, %c0_5, %c0_6] : memref<1x4x8x128xf32, #tpu.memory_space<vmem>>, vector<1x1x8x128xf32>
    %6 = vector.shape_cast %5 : vector<1x1x8x128xf32> to vector<8x128xf32>
    %c0_7 = arith.constant 0 : index
    %c1 = arith.constant 1 : index
    %c0_8 = arith.constant 0 : index
    %c0_9 = arith.constant 0 : index
    %7 = vector.load %arg2[%c0_7, %c1, %c0_8, %c0_9] : memref<1x4x8x128xf32, #tpu.memory_space<vmem>>, vector<1x1x8x128xf32>
    %8 = vector.shape_cast %7 : vector<1x1x8x128xf32> to vector<8x128xf32>
    %9 = arith.maximumf %6, %8 : vector<8x128xf32>
    %c0_10 = arith.constant 0 : index
    %c2 = arith.constant 2 : index
    %c0_11 = arith.constant 0 : index
    %c0_12 = arith.constant 0 : index
    %10 = vector.load %arg2[%c0_10, %c2, %c0_11, %c0_12] : memref<1x4x8x128xf32, #tpu.memory_space<vmem>>, vector<1x1x8x128xf32>
    %11 = vector.shape_cast %10 : vector<1x1x8x128xf32> to vector<8x128xf32>
    %12 = arith.maximumf %9, %11 : vector<8x128xf32>
    %c0_13 = arith.constant 0 : index
    %c3 = arith.constant 3 : index
    %c0_14 = arith.constant 0 : index
    %c0_15 = arith.constant 0 : index
    %13 = vector.load %arg2[%c0_13, %c3, %c0_14, %c0_15] : memref<1x4x8x128xf32, #tpu.memory_space<vmem>>, vector<1x1x8x128xf32>
    %14 = vector.shape_cast %13 : vector<1x1x8x128xf32> to vector<8x128xf32>
    %15 = arith.maximumf %12, %14 : vector<8x128xf32>
    %cst = arith.constant 0.000000e+00 : f32
    %16 = vector.broadcast %cst : f32 to vector<8x128xf32>
    %cst_16 = arith.constant 0.000000e+00 : f32
    %17 = vector.broadcast %cst_16 : f32 to vector<8x128xf32>
    %cst_17 = arith.constant 0.000000e+00 : f32
    %18 = vector.broadcast %cst_17 : f32 to vector<8x128xf32>
    %c0_18 = arith.constant 0 : index
    %c0_19 = arith.constant 0 : index
    %c0_20 = arith.constant 0 : index
    %c0_21 = arith.constant 0 : index
    %19 = vector.load %arg2[%c0_18, %c0_19, %c0_20, %c0_21] : memref<1x4x8x128xf32, #tpu.memory_space<vmem>>, vector<1x1x8x128xf32>
    %20 = vector.shape_cast %19 : vector<1x1x8x128xf32> to vector<8x128xf32>
    %21 = arith.subf %20, %15 : vector<8x128xf32>
    %22 = math.exp %21 : vector<8x128xf32>
    %23 = arith.addf %16, %22 : vector<8x128xf32>
    %c0_i32_22 = arith.constant 0 : i32
    %24 = vector.broadcast %c0_i32_22 : i32 to vector<8x128xi32>
    %25 = arith.cmpi eq, %4, %24 : vector<8x128xi32>
    %26 = arith.select %25, %22, %17 : vector<8x128xi1>, vector<8x128xf32>
    %27 = arith.select %25, %20, %18 : vector<8x128xi1>, vector<8x128xf32>
    %c0_23 = arith.constant 0 : index
    %c1_24 = arith.constant 1 : index
    %c0_25 = arith.constant 0 : index
    %c0_26 = arith.constant 0 : index
    %28 = vector.load %arg2[%c0_23, %c1_24, %c0_25, %c0_26] : memref<1x4x8x128xf32, #tpu.memory_space<vmem>>, vector<1x1x8x128xf32>
    %29 = vector.shape_cast %28 : vector<1x1x8x128xf32> to vector<8x128xf32>
    %30 = arith.subf %29, %15 : vector<8x128xf32>
    %31 = math.exp %30 : vector<8x128xf32>
    %32 = arith.addf %23, %31 : vector<8x128xf32>
    %c1_i32 = arith.constant 1 : i32
    %33 = vector.broadcast %c1_i32 : i32 to vector<8x128xi32>
    %34 = arith.cmpi eq, %4, %33 : vector<8x128xi32>
    %35 = arith.select %34, %31, %26 : vector<8x128xi1>, vector<8x128xf32>
    %36 = arith.select %34, %29, %27 : vector<8x128xi1>, vector<8x128xf32>
    %c0_27 = arith.constant 0 : index
    %c2_28 = arith.constant 2 : index
    %c0_29 = arith.constant 0 : index
    %c0_30 = arith.constant 0 : index
    %37 = vector.load %arg2[%c0_27, %c2_28, %c0_29, %c0_30] : memref<1x4x8x128xf32, #tpu.memory_space<vmem>>, vector<1x1x8x128xf32>
    %38 = vector.shape_cast %37 : vector<1x1x8x128xf32> to vector<8x128xf32>
    %39 = arith.subf %38, %15 : vector<8x128xf32>
    %40 = math.exp %39 : vector<8x128xf32>
    %41 = arith.addf %32, %40 : vector<8x128xf32>
    %c2_i32 = arith.constant 2 : i32
    %42 = vector.broadcast %c2_i32 : i32 to vector<8x128xi32>
    %43 = arith.cmpi eq, %4, %42 : vector<8x128xi32>
    %44 = arith.select %43, %40, %35 : vector<8x128xi1>, vector<8x128xf32>
    %45 = arith.select %43, %38, %36 : vector<8x128xi1>, vector<8x128xf32>
    %c0_31 = arith.constant 0 : index
    %c3_32 = arith.constant 3 : index
    %c0_33 = arith.constant 0 : index
    %c0_34 = arith.constant 0 : index
    %46 = vector.load %arg2[%c0_31, %c3_32, %c0_33, %c0_34] : memref<1x4x8x128xf32, #tpu.memory_space<vmem>>, vector<1x1x8x128xf32>
    %47 = vector.shape_cast %46 : vector<1x1x8x128xf32> to vector<8x128xf32>
    %48 = arith.subf %47, %15 : vector<8x128xf32>
    %49 = math.exp %48 : vector<8x128xf32>
    %50 = arith.addf %41, %49 : vector<8x128xf32>
    %c3_i32 = arith.constant 3 : i32
    %51 = vector.broadcast %c3_i32 : i32 to vector<8x128xi32>
    %52 = arith.cmpi eq, %4, %51 : vector<8x128xi32>
    %53 = arith.select %52, %49, %44 : vector<8x128xi1>, vector<8x128xf32>
    %54 = arith.select %52, %47, %45 : vector<8x128xi1>, vector<8x128xf32>
    %55 = math.log %50 : vector<8x128xf32>
    %56 = arith.addf %15, %55 : vector<8x128xf32>
    %57 = arith.subf %56, %54 : vector<8x128xf32>
    %cst_35 = arith.constant 0.000000e+00 : f32
    %58 = vector.broadcast %cst_35 : f32 to vector<8x128xf32>
    %59 = arith.maximumf %57, %58 : vector<8x128xf32>
    %60 = tpu.reciprocal %50 {approx = true} : vector<8x128xf32> -> vector<8x128xf32>
    %61 = arith.mulf %53, %60 : vector<8x128xf32>
    %cst_36 = arith.constant 1.000000e+00 : f32
    %62 = vector.broadcast %cst_36 : f32 to vector<8x128xf32>
    %63 = arith.subf %62, %61 : vector<8x128xf32>
    %cst_37 = arith.constant 0.000000e+00 : f32
    %cst_38 = arith.constant 1.000000e+00 : f32
    %64 = vector.broadcast %cst_37 : f32 to vector<8x128xf32>
    %65 = arith.maximumf %64, %63 : vector<8x128xf32>
    %66 = vector.broadcast %cst_38 : f32 to vector<8x128xf32>
    %67 = arith.minimumf %66, %65 : vector<8x128xf32>
    %68 = arith.mulf %67, %67 : vector<8x128xf32>
    %69 = arith.mulf %68, %59 : vector<8x128xf32>
    %c0_i32_39 = arith.constant 0 : i32
    %70 = arith.cmpi eq, %arg1, %c0_i32_39 : i32
    %71 = arith.extui %70 : i1 to i32
    %c0_i32_40 = arith.constant 0 : i32
    %72 = arith.cmpi ne, %71, %c0_i32_40 : i32
    scf.if %72 {
      %76 = tpu.iota {dimensions = array<i32: 0>} : vector<8x128xi32>
      %77 = tpu.iota {dimensions = array<i32: 1>} : vector<8x128xi32>
      %c8_i32 = arith.constant 8 : i32
      %78 = arith.muli %arg1, %c8_i32 : i32
      %79 = vector.broadcast %78 : i32 to vector<8x128xi32>
      %80 = arith.addi %79, %76 : vector<8x128xi32>
      %c128_i32 = arith.constant 128 : i32
      %81 = vector.broadcast %c128_i32 : i32 to vector<8x128xi32>
      %82 = arith.muli %80, %81 : vector<8x128xi32>
      %83 = arith.addi %82, %77 : vector<8x128xi32>
      %c256_i32 = arith.constant 256 : i32
      %84 = vector.broadcast %c256_i32 : i32 to vector<8x128xi32>
      %85 = arith.cmpi slt, %83, %84 : vector<8x128xi32>
      %cst_43 = arith.constant 0.000000e+00 : f32
      %86 = vector.broadcast %cst_43 : f32 to vector<8x128xf32>
      %87 = arith.select %85, %69, %86 : vector<8x128xi1>, vector<8x128xf32>
      %88 = vector.shape_cast %87 : vector<8x128xf32> to vector<1x8x128xf32>
      %cst_44 = arith.constant dense<0.000000e+00> : vector<8x128xf32>
      %89 = vector.multi_reduction <add>, %88, %cst_44 [0] : vector<1x8x128xf32> to vector<8x128xf32>
      %c0_45 = arith.constant 0 : index
      %c0_46 = arith.constant 0 : index
      %c0_47 = arith.constant 0 : index
      %90 = vector.load %arg4[%c0_45, %c0_46, %c0_47] : memref<1x8x128xf32, #tpu.memory_space<vmem>>, vector<1x8x128xf32>
      %91 = vector.shape_cast %89 : vector<8x128xf32> to vector<1x8x128xf32>
      %92 = arith.addf %90, %91 : vector<1x8x128xf32>
      %c0_48 = arith.constant 0 : index
      %c0_49 = arith.constant 0 : index
      %c0_50 = arith.constant 0 : index
      %93 = vector.load %arg4[%c0_48, %c0_49, %c0_50] : memref<1x8x128xf32, #tpu.memory_space<vmem>>, vector<1x8x128xf32>
      tpu.vector_store %arg4[%c0_48, %c0_49, %c0_50], %92 {strides = array<i32>} : memref<1x8x128xf32, #tpu.memory_space<vmem>>, vector<1x8x128xf32>,
    } else {
    }
    %c0_i32_41 = arith.constant 0 : i32
    %73 = arith.cmpi ne, %arg1, %c0_i32_41 : i32
    %74 = arith.extui %73 : i1 to i32
    %c0_i32_42 = arith.constant 0 : i32
    %75 = arith.cmpi ne, %74, %c0_i32_42 : i32
    scf.if %75 {
      %76 = vector.shape_cast %69 : vector<8x128xf32> to vector<1x8x128xf32>
      %cst_43 = arith.constant dense<0.000000e+00> : vector<8x128xf32>
      %77 = vector.multi_reduction <add>, %76, %cst_43 [0] : vector<1x8x128xf32> to vector<8x128xf32>
      %c0_44 = arith.constant 0 : index
      %c0_45 = arith.constant 0 : index
      %c0_46 = arith.constant 0 : index
      %78 = vector.load %arg4[%c0_44, %c0_45, %c0_46] : memref<1x8x128xf32, #tpu.memory_space<vmem>>, vector<1x8x128xf32>
      %79 = vector.shape_cast %77 : vector<8x128xf32> to vector<1x8x128xf32>
      %80 = arith.addf %78, %79 : vector<1x8x128xf32>
      %c0_47 = arith.constant 0 : index
      %c0_48 = arith.constant 0 : index
      %c0_49 = arith.constant 0 : index
      %81 = vector.load %arg4[%c0_47, %c0_48, %c0_49] : memref<1x8x128xf32, #tpu.memory_space<vmem>>, vector<1x8x128xf32>
      tpu.vector_store %arg4[%c0_47, %c0_48, %c0_49], %80 {strides = array<i32>} : memref<1x8x128xf32, #tpu.memory_space<vmem>>, vector<1x8x128xf32>,
    } else {
    }
    return
  }
  func.func @transform_0(%arg0: i32, %arg1: i32) -> (i32, i32, i32, i32) {
    %c0_i32 = arith.constant 0 : i32
    %c0_i32_0 = arith.constant 0 : i32
    %c0_i32_1 = arith.constant 0 : i32
    return %arg0, %c0_i32, %arg1, %c0_i32_0 : i32, i32, i32, i32
  }
  func.func @transform_1(%arg0: i32, %arg1: i32) -> (i32, i32, i32) {
    %c0_i32 = arith.constant 0 : i32
    %c0_i32_0 = arith.constant 0 : i32
    return %arg0, %arg1, %c0_i32 : i32, i32, i32
  }
  func.func @transform_2(%arg0: i32, %arg1: i32) -> (i32, i32, i32) {
    %c0_i32 = arith.constant 0 : i32
    %c0_i32_0 = arith.constant 0 : i32
    %c0_i32_1 = arith.constant 0 : i32
    return %arg0, %c0_i32, %c0_i32_0 : i32, i32, i32
  }
}

</mosaic_0001>

<llo_original>
// kernel: tpu_custom_call.1
$region0: #{tpu_custom_call.1}
  #allocation0 [shape = 'u32[]', space=smem, size = 0x4, offset = 0x4, fixed_abs, tag = 'smem constant byte address 0x4 - core index']
  #allocation1 [shape = 'u32[144,128]{1,0:T(1,128)}', space=vmem, size = 0x12000, scoped, tag = 'internal scratch']
  #allocation8 [shape = 's32[]', space=sflag, size = 0x4, offset = 0, fixed_abs, tag = 'sflag constant byte address 0x0 - dummy sync flag']
  %s0 = inlined_call_operand.hbm [shape: f32[2,4,2,128], index: 0, kind: input, shape index: {}]
  %s1 = inlined_call_operand.hbm [shape: s32[2,2,128], index: 1, kind: input, shape index: {}]
  %s2 = inlined_call_operand.hbm [shape: f32[2,8,128], index: 2, kind: output, shape index: {}]
  %s3 = sld [smem:[#allocation0]]
  $region61: #{tpu_custom_call.1} parent=0
    _
  %s5 = ssub.s32 1, %s3
  %s6 = scalar_select 0, %s5, %s3
  $region1: #{tpu_custom_call.1} parent=0
    #allocation2 [shape = 'u8[32768]{0}', space=vmem, size = 0x8000, scoped, tag = 'input window, operand 0']
    #allocation3 [shape = 's32[2]{0}', space=sflag, size = 0x8, scoped, tag = 'scoped memory for tpu_custom_call.1']
    #allocation4 [shape = 's32[2]{0}', space=sflag, size = 0x8, scoped, tag = 'scoped memory for tpu_custom_call.1']
    #allocation5 [shape = 'u8[8192]{0}', space=vmem, size = 0x2000, scoped, tag = 'input window, operand 1']
    #allocation6 [shape = 's32[2]{0}', space=sflag, size = 0x8, scoped, tag = 'scoped memory for tpu_custom_call.1']
    #allocation7 [shape = 'u8[8192]{0}', space=vmem, size = 0x2000, scoped, tag = 'output window, operand 0']
    %7 = vsyncpa [#allocation3], 0
    %s8 = scalar_lea.sflag [#allocation3], 1
    %9 = vsyncpa %s8, 0
    %10 = vsyncpa [#allocation6], 0
    %s11 = scalar_lea.sflag [#allocation6], 1
    %12 = vsyncpa %s11, 0
    %13 = vsyncpa [#allocation4], 0
    %s14 = scalar_lea.sflag [#allocation4], 1
    %15 = vsyncpa %s14, 0
    loop: start=0, step=1, limit=4
    $region2: #{tpu_custom_call.1} parent=1 // loop_pre_header
      _
    $region3: #{tpu_custom_call.1} parent=1 // loop_header
      %s17 = sphi 0, %s21
      %p18 = scmp.ge.s32.totalorder %s17, 4
      %s24 = sphi 0, %s36
      %s25 = sphi 0, %s32
      %s26 = sphi 0, %s24
      %s27 = sphi 0, %s25
      %s28 = sphi 0, %s26
      %s29 = sphi 0, %s27
      %s41 = sphi 0, %s43
      %s44 = sphi 0, %s41
      %s45 = sphi 0, %s44
      %s61 = sphi 0, %s45
      %s69 = sphi 0, %s71
      %s72 = sphi 0, %s69
      %s73 = sphi 0, %s72
      %s89 = sphi 0, %s73
      %s95 = sphi 0, %s97
      %s98 = sphi 0, %s95
      %s99 = sphi 0, %s98
      %s115 = sphi 0, %s99
    $region4: #{tpu_custom_call.1} parent=1 // loop_header_branch
      %20 = sbr.rel (%p18) target = $region8
    $region5: #{tpu_custom_call.1} parent=1 // loop_body
      %s22 = ssub.s32 %s17, 1
      %s23 = ssub.s32 %s17, 2
      %s30 = sadd.s32 1, %s25
      %p31 = scmp.ge.s32.totalorder %s30, 1
      %s32 = scalar_select %p31, 0, %s30
      %s33 = sadd.s32 1, %s24
      %s34 = scalar_select %p31, %s33, %s24
      %p35 = scmp.ge.s32.totalorder %s34, 2
      %s36 = scalar_select %p35, 0, %s34
      %s37 = ssub.s32 %s24, %s36
      %s38 = ssub.s32 %s25, %s32
      %s39 = sor.u32 %s37, %s38
      %p40 = scmp.eq.s32.totalorder %s39, 0
      %s42 = sadd.s32 %s41, 1
      %s43 = scalar_select %p40, %s41, %s42
      %p46 = pneg %p40
      %p47 = scmp.eq.s32.totalorder %s17, 1
      %p48 = por %p46, %p47
      %p49 = scmp.ne.s32.totalorder %s41, %s44
      %p50 = scmp.eq.s32.totalorder %s17, 0
      %p51 = por %p49, %p50
      %p52 = scmp.ne.s32.totalorder %s41, %s44
      %p53 = scmp.eq.s32.totalorder %s22, 1
      %p54 = por %p52, %p53
      %p55 = scmp.ne.s32.totalorder %s44, %s45
      %p56 = scmp.eq.s32.totalorder %s22, 0
      %p57 = por %p55, %p56
      %p58 = scmp.ne.s32.totalorder %s44, %s45
      %p59 = scmp.eq.s32.totalorder %s23, 1
      %p60 = por %p58, %p59
      %p62 = scmp.ne.s32.totalorder %s45, %s61
      %p63 = scmp.eq.s32.totalorder %s23, 0
      %p64 = por %p62, %p63
      %s65 = ssub.s32 %s24, %s36
      %s66 = ssub.s32 %s25, %s32
      %s67 = sor.u32 %s65, %s66
      %p68 = scmp.eq.s32.totalorder %s67, 0
      %s70 = sadd.s32 %s69, 1
      %s71 = scalar_select %p68, %s69, %s70
      %p74 = pneg %p68
      %p75 = scmp.eq.s32.totalorder %s17, 1
      %p76 = por %p74, %p75
      %p77 = scmp.ne.s32.totalorder %s69, %s72
      %p78 = scmp.eq.s32.totalorder %s17, 0
      %p79 = por %p77, %p78
      %p80 = scmp.ne.s32.totalorder %s69, %s72
      %p81 = scmp.eq.s32.totalorder %s22, 1
      %p82 = por %p80, %p81
      %p83 = scmp.ne.s32.totalorder %s72, %s73
      %p84 = scmp.eq.s32.totalorder %s22, 0
      %p85 = por %p83, %p84
      %p86 = scmp.ne.s32.totalorder %s72, %s73
      %p87 = scmp.eq.s32.totalorder %s23, 1
      %p88 = por %p86, %p87
      %p90 = scmp.ne.s32.totalorder %s73, %s89
      %p91 = scmp.eq.s32.totalorder %s23, 0
      %p92 = por %p90, %p91
      %s93 = ssub.s32 %s24, %s36
      %p94 = scmp.eq.s32.totalorder %s93, 0
      %s96 = sadd.s32 %s95, 1
      %s97 = scalar_select %p94, %s95, %s96
      %p100 = pneg %p94
      %p101 = scmp.eq.s32.totalorder %s17, 1
      %p102 = por %p100, %p101
      %p103 = scmp.ne.s32.totalorder %s95, %s98
      %p104 = scmp.eq.s32.totalorder %s17, 0
      %p105 = por %p103, %p104
      %p106 = scmp.ne.s32.totalorder %s95, %s98
      %p107 = scmp.eq.s32.totalorder %s22, 1
      %p108 = por %p106, %p107
      %p109 = scmp.ne.s32.totalorder %s98, %s99
      %p110 = scmp.eq.s32.totalorder %s22, 0
      %p111 = por %p109, %p110
      %p112 = scmp.ne.s32.totalorder %s98, %s99
      %p113 = scmp.eq.s32.totalorder %s23, 1
      %p114 = por %p112, %p113
      %p116 = scmp.ne.s32.totalorder %s99, %s115
      %p117 = scmp.eq.s32.totalorder %s23, 0
      %p118 = por %p116, %p117
      %p119 = scmp.le.s32.totalorder 1, %s17
      %p120 = scmp.lt.s32.totalorder %s17, 3
      %p121 = pnand %p119, %p120
      %p122 = pneg %p121
      // Predicated region
      $region9: #{tpu_custom_call.1} parent=5 // pred_check
        _
      $region10: #{tpu_custom_call.1} parent=5 // pred_check_branch
        %124 = sbr.rel (%p121) target = $region12
      $region11: #{tpu_custom_call.1} parent=5 // pred_region
        %s125 = ssub.s32 %s17, 1
      $region12: #{tpu_custom_call.1} parent=5 // pred_fallthru
        _
      %p126 = scmp.lt.s32.totalorder %s17, 2
      // Predicated region
      $region13: #{tpu_custom_call.1} parent=5 // pred_check
        %p127 = pneg %p126
      $region14: #{tpu_custom_call.1} parent=5 // pred_check_branch
        %129 = sbr.rel (%p127) target = $region16
      $region15: #{tpu_custom_call.1} parent=5 // pred_region
        // Predicated region
        $region17: #{tpu_custom_call.1} parent=15 // pred_check
          %p130 = pneg %p51
        $region18: #{tpu_custom_call.1} parent=15 // pred_check_branch
          %132 = sbr.rel (%p130) target = $region20
        $region19: #{tpu_custom_call.1} parent=15 // pred_region
          #allocation9 [shape = 'u32[6]{0}', space=smem, size = 0x18, scoped, tag = 'DMA stride descriptor']
          %s133 = sand.u32 %s41, 1
          %s134 = scalar_lea.sflag [#allocation3], %s133
          %s135 = sand.u32 %s41, 1
          %s136 = smul.addr %s135, 32
          %s137 = scalar_lea.vmem [#allocation2], %s136
          %s138 = smul.u32 4, %s25
          %s139 = ssub.s32 1, %s138
          %s140 = smul.u32 128, %s139
          %s142 = ssub.s32 512, %s140
          %143 = vsyncadd %s134, %s142
          %p144 = scmp.ne.s32.totalorder 0, %s140
          %s145 = smul.addr %s24, 4
          %s146 = sadd.s32 %s138, %s145
          %s147 = smul.addr %s146, 32
          %s148 = scalar_lea.hbm %s0, %s147
          %s149 = smul.u32 2, %s139
          %s150 = smul.u32 %s149, 4
          %s152 = sshll.u32 1, 14
          %s153 = sxor.u32 4294967295, %s152
          %s155 = sld [smem:[#allocation0]]
          %s156 = sadd.s32 2, %s155
          %s158 = sshll.u32 7, 26
          %s159 = sxor.u32 4294967295, %s158
          %s160 = sand.u32 0, %s159
          %s161 = sshll.u32 %s156, 26
          %s162 = sor.u32 %s160, %s161
          %s163 = sshll.u32 %s137, 4
          %s164 = int_to_ptr.vmem [resolvable:$true] %s163
          %s165 = sshll.u32 %s150, 4
          %170 = sst [smem:[#allocation9]] 32
          %s171 = scalar_lea.smem [#allocation9], 1
          %172 = sst [smem:[%s171]] 128
          %s173 = scalar_lea.smem [#allocation9], 2
          %174 = sst [smem:[%s173]] %s139
          %s175 = scalar_lea.smem [#allocation9], 3
          %176 = sst [smem:[%s175]] 32
          %s177 = scalar_lea.smem [#allocation9], 4
          %178 = sst [smem:[%s177]] 32
          %s179 = scalar_lea.smem [#allocation9], 5
          %180 = sst [smem:[%s179]] 2
          %182 = dma.general (%p144), %s148, %s165, %s164, %s134, 131072, [#allocation9], %s162, 0
        $region20: #{tpu_custom_call.1} parent=15 // pred_fallthru
          _
        // Predicated region
        $region21: #{tpu_custom_call.1} parent=15 // pred_check
          %p183 = pneg %p79
        $region22: #{tpu_custom_call.1} parent=15 // pred_check_branch
          %185 = sbr.rel (%p183) target = $region24
        $region23: #{tpu_custom_call.1} parent=15 // pred_region
          %s186 = sand.u32 %s69, 1
          %s187 = scalar_lea.sflag [#allocation6], %s186
          %s188 = sand.u32 %s69, 1
          %s189 = smul.addr %s188, 8
          %s190 = scalar_lea.vmem [#allocation5], %s189
          %s191 = smul.u32 4, %s25
          %s192 = ssub.s32 1, %s191
          %s193 = smul.u32 32, %s192
          %s195 = ssub.s32 128, %s193
          %196 = vsyncadd %s187, %s195
          %p197 = scmp.ne.s32.totalorder 0, %s193
          %s198 = sadd.s32 %s191, %s24
          %s199 = smul.addr %s198, 32
          %s200 = scalar_lea.hbm %s1, %s199
          %s201 = smul.u32 2, %s192
          %s202 = sshll.u32 %s190, 4
          %s203 = int_to_ptr.vmem [resolvable:$true] %s202
          %s204 = sshll.u32 %s201, 4
          %208 = dma.hbm_to_vmem [thread:$0]  (%p197), %s200, %s204, %s203, %s187, 32, 32, 2
        $region24: #{tpu_custom_call.1} parent=15 // pred_fallthru
          _
      $region16: #{tpu_custom_call.1} parent=5 // pred_fallthru
        _
      %p209 = scmp.le.s32.totalorder 1, %s17
      %p210 = scmp.lt.s32.totalorder %s17, 3
      %p211 = pnand %p209, %p210
      %p212 = pneg %p211
      // Predicated region
      $region25: #{tpu_custom_call.1} parent=5 // pred_check
        _
      $region26: #{tpu_custom_call.1} parent=5 // pred_check_branch
        %214 = sbr.rel (%p211) target = $region28
      $region27: #{tpu_custom_call.1} parent=5 // pred_region
        %s215 = ssub.s32 %s17, 1
        %s216 = sand.u32 %s44, 1
        %s217 = scalar_lea.sflag [#allocation3], %s216
        %s218 = sand.u32 %s44, 1
        %s219 = smul.addr %s218, 32
        %s220 = scalar_lea.vmem [#allocation2], %s219
        // Predicated region
        $region29: #{tpu_custom_call.1} parent=27 // pred_check
          %p221 = pneg %p57
        $region30: #{tpu_custom_call.1} parent=27 // pred_check_branch
          %223 = sbr.rel (%p221) target = $region32
        $region31: #{tpu_custom_call.1} parent=27 // pred_region
          %224 = dma.done %s217, 512
        $region32: #{tpu_custom_call.1} parent=27 // pred_fallthru
          _
        %s225 = sand.u32 %s72, 1
        %s226 = scalar_lea.sflag [#allocation6], %s225
        %s227 = sand.u32 %s72, 1
        %s228 = smul.addr %s227, 8
        %s229 = scalar_lea.vmem [#allocation5], %s228
        // Predicated region
        $region33: #{tpu_custom_call.1} parent=27 // pred_check
          %p230 = pneg %p85
        $region34: #{tpu_custom_call.1} parent=27 // pred_check_branch
          %232 = sbr.rel (%p230) target = $region36
        $region35: #{tpu_custom_call.1} parent=27 // pred_region
          %233 = dma.done %s226, 128
        $region36: #{tpu_custom_call.1} parent=27 // pred_fallthru
          _
        %s234 = sand.u32 %s44, 1
        %s235 = scalar_lea.sflag [#allocation3], %s234
        %s236 = sand.u32 %s44, 1
        %s237 = smul.addr %s236, 32
        %s238 = scalar_lea.vmem [#allocation2], %s237
        %p239 = pneg %p57
        %p240 = pneg %p54
        %s241 = sand.u32 %s72, 1
        %s242 = scalar_lea.sflag [#allocation6], %s241
        %s243 = sand.u32 %s72, 1
        %s244 = smul.addr %s243, 8
        %s245 = scalar_lea.vmem [#allocation5], %s244
        %p246 = pneg %p85
        %p247 = pneg %p82
        %p248 = pneg %p111
        %p249 = pneg %p108
        %s250 = sand.u32 %s98, 1
        %s251 = scalar_lea.sflag [#allocation4], %s250
        %s252 = sand.u32 %s98, 1
        %s253 = smul.addr %s252, 8
        %s254 = scalar_lea.vmem [#allocation7], %s253
        %s255 = smul.u32 4, %s27
        %s256 = ssub.s32 1, %s255
        %s257 = smul.u32 128, %s256
        %s258 = smul.u32 4, %s27
        %s259 = ssub.s32 1, %s258
        %s260 = smul.u32 32, %s259
        %p261 = scmp.eq.s32.totalorder %s27, 0
        // Predicated region
        $region37: #{tpu_custom_call.1} parent=27 // pred_check
          %p262 = pneg %p261
        $region38: #{tpu_custom_call.1} parent=27 // pred_check_branch
          %264 = sbr.rel (%p262) target = $region40
        $region39: #{tpu_custom_call.1} parent=27 // pred_region
          %265 = vst [vmem:[%s254] sm:$0xff] 0.0
        $region40: #{tpu_custom_call.1} parent=27 // pred_fallthru
          _
        %v266 = vld [vmem:[%s229] sm:$0xff]
        %v267 = vld [vmem:[%s220] sm:$0xff]
        %s268 = scalar_lea.vmem %s220, 8 [#allocation2]
        %v269 = vld [vmem:[%s268] sm:$0xff]
        %v270 = vmax.f32 %v267, %v269
        %s271 = scalar_lea.vmem %s220, 16 [#allocation2]
        %v272 = vld [vmem:[%s271] sm:$0xff]
        %v273 = vmax.f32 %v270, %v272
        %s274 = scalar_lea.vmem %s220, 24 [#allocation2]
        %v275 = vld [vmem:[%s274] sm:$0xff]
        %v276 = vmax.f32 %v273, %v275
        %v277 = vsub.f32 %v267, %v276
        %v278 = vmul.f32 %v277, 1.442695
        %v279 = vpow.pop %v278
        %v280 = vadd.f32 %v279, 0.0
        %vm281 = vcmp.eq.s32.totalorder %v266, 0
        %v282 = vsel %vm281, %v279, 0.0
        %v283 = vsel %vm281, %v267, 0.0
        %v284 = vsub.f32 %v269, %v276
        %v285 = vmul.f32 %v284, 1.442695
        %v286 = vpow.pop %v285
        %v287 = vadd.f32 %v280, %v286
        %vm288 = vcmp.eq.s32.totalorder %v266, 1
        %v289 = vsel %vm288, %v286, %v282
        %v290 = vsel %vm288, %v269, %v283
        %v291 = vsub.f32 %v272, %v276
        %v292 = vmul.f32 %v291, 1.442695
        %v293 = vpow.pop %v292
        %v294 = vadd.f32 %v287, %v293
        %vm295 = vcmp.eq.s32.totalorder %v266, 2
        %v296 = vsel %vm295, %v293, %v289
        %v297 = vsel %vm295, %v272, %v290
        %v298 = vsub.f32 %v275, %v276
        %v299 = vmul.f32 %v298, 1.442695
        %v300 = vpow.pop %v299
        %v301 = vadd.f32 %v294, %v300
        %vm302 = vcmp.eq.s32.totalorder %v266, 3
        %v303 = vsel %vm302, %v300, %v296
        %v304 = vsel %vm302, %v275, %v297
        %v305 = vlog2.pop %v301
        %v306 = vmul.f32 %v305, 0.6931472
        %v307 = vadd.f32 %v276, %v306
        %v308 = vsub.f32 %v307, %v304
        %v309 = vmax.f32 %v308, 0.0
        %v310 = vrcp.pop %v301
        %v311 = vmul.f32 %v303, %v310
        %v312 = vsub.f32 1.0, %v311
        %v313 = vmax.f32 %v312, 0.0
        %v314 = vmin.f32 %v313, 1.0
        %v315 = vmul.f32 %v314, %v314
        %v316 = vmul.f32 %v315, %v309
        // Predicated region
        $region41: #{tpu_custom_call.1} parent=27 // pred_check
          %p317 = pneg %p261
        $region42: #{tpu_custom_call.1} parent=27 // pred_check_branch
          %319 = sbr.rel (%p317) target = $region44
        $region43: #{tpu_custom_call.1} parent=27 // pred_region
          %v320 = vlaneseq
          %v321 = vshrl.u32 %v320, 7
          %v322 = vlaneseq
          %v323 = vand.u32 %v322, 127
          %s324 = smul.u32 %s27, 8
          %v325 = vstv %s324
          %v326 = vadd.s32 %v325, %v321
          %v327 = vmul.u32 %v326, 128
          %v328 = vadd.s32 %v327, %v323
          %vm329 = vcmp.lt.s32.totalorder %v328, 256
          %v330 = vsel %vm329, %v316, 0.0
          %v331 = vadd.f32 %v330, 0.0
          %v332 = vld [vmem:[%s254] sm:$0xff]
          %v333 = vadd.f32 %v332, %v331
          %334 = vst [vmem:[%s254] sm:$0xff] %v333
        $region44: #{tpu_custom_call.1} parent=27 // pred_fallthru
          _
        %p335 = scmp.ne.s32.totalorder %s27, 0
        // Predicated region
        $region45: #{tpu_custom_call.1} parent=27 // pred_check
          %p336 = pneg %p335
        $region46: #{tpu_custom_call.1} parent=27 // pred_check_branch
          %338 = sbr.rel (%p336) target = $region48
        $region47: #{tpu_custom_call.1} parent=27 // pred_region
          %v339 = vadd.f32 %v316, 0.0
          %v340 = vld [vmem:[%s254] sm:$0xff]
          %v341 = vadd.f32 %v340, %v339
          %342 = vst [vmem:[%s254] sm:$0xff] %v341
        $region48: #{tpu_custom_call.1} parent=27 // pred_fallthru
          _
        %s343 = sand.u32 %s98, 1
        %s344 = scalar_lea.sflag [#allocation4], %s343
        %s345 = sand.u32 %s98, 1
        %s346 = smul.addr %s345, 8
        %s347 = scalar_lea.vmem [#allocation7], %s346
        // Predicated region
        $region49: #{tpu_custom_call.1} parent=27 // pred_check
          %p348 = pneg %p108
        $region50: #{tpu_custom_call.1} parent=27 // pred_check_branch
          %350 = sbr.rel (%p348) target = $region52
        $region51: #{tpu_custom_call.1} parent=27 // pred_region
          %s352 = ssub.s32 128, 128
          %353 = vsyncadd %s344, %s352
          %s354 = smul.addr %s26, 128
          %s355 = scalar_lea.hbm %s2, %s354
          %s357 = sshll.u32 %s347, 4
          %s358 = int_to_ptr.vmem [resolvable:$true] %s357
          %360 = dma.vmem_to_hbm [thread:$0]  %s358, 128, %s355, %s344
        $region52: #{tpu_custom_call.1} parent=27 // pred_fallthru
          _
      $region28: #{tpu_custom_call.1} parent=5 // pred_fallthru
        _
      %p361 = scmp.le.s32.totalorder 2, %s17
      // Predicated region
      $region53: #{tpu_custom_call.1} parent=5 // pred_check
        %p362 = pneg %p361
      $region54: #{tpu_custom_call.1} parent=5 // pred_check_branch
        %364 = sbr.rel (%p362) target = $region56
      $region55: #{tpu_custom_call.1} parent=5 // pred_region
        %s365 = ssub.s32 %s17, 2
        // Predicated region
        $region57: #{tpu_custom_call.1} parent=55 // pred_check
          %p366 = pneg %p114
        $region58: #{tpu_custom_call.1} parent=55 // pred_check_branch
          %368 = sbr.rel (%p366) target = $region60
        $region59: #{tpu_custom_call.1} parent=55 // pred_region
          %s369 = sand.u32 %s99, 1
          %s370 = scalar_lea.sflag [#allocation4], %s369
          %s371 = sand.u32 %s99, 1
          %s372 = smul.addr %s371, 8
          %s373 = scalar_lea.vmem [#allocation7], %s372
          %374 = dma.done %s370, 128
        $region60: #{tpu_custom_call.1} parent=55 // pred_fallthru
          _
      $region56: #{tpu_custom_call.1} parent=5 // pred_fallthru
        _
    $region6: #{tpu_custom_call.1} parent=1 // loop_footer
      %s21 = sadd.s32 1, %s17
    $region7: #{tpu_custom_call.1} parent=1 // loop_footer_branch
      %16 = sbr.rel target = $region3
    $region8: #{tpu_custom_call.1} parent=1 // loop_exit
      _
    %375 = vsyncpa [#allocation3], 1
    %s376 = scalar_lea.sflag [#allocation3], 1
    %377 = vsyncpa %s376, 1
    %378 = vsyncpa [#allocation6], 1
    %s379 = scalar_lea.sflag [#allocation6], 1
    %380 = vsyncpa %s379, 1
    %381 = vsyncpa [#allocation4], 1
    %s382 = scalar_lea.sflag [#allocation4], 1
    %383 = vsyncpa %s382, 1

</llo_original>
